<compile_context>
chip_gen: v5e
topology: v5e:2x2
jax: 0.10.0
libtpu: 0.0.40
codegen_flags: <defaults>
</compile_context>

<pallas_src>
import functools

import jax
import jax.numpy as jnp
from jax import lax
from jax.experimental import pallas as pl
from jax.experimental.pallas import tpu as pltpu


def _focal_loss_kernel(pred_ref, label_ref, out_ref, acc_ref, *,
                       alpha, gamma, inv_n, rows_valid, row_tile, nb_inner):
    """One (row_tile, S) block: elementwise focal loss, VPU accumulation.

    Grid = (core_split, row_block). The inner axis is the reduction axis; the
    per-core partial mean is written on its last step.
    """
    c = pl.program_id(0)          # core-split index (parallel)
    i = pl.program_id(1)          # row-block index within this split (arbitrary)

    @pl.when(i == 0)
    def _init():
        acc_ref[...] = jnp.zeros_like(acc_ref)

    # Logical (un-clamped) row-block index. The index_map clamps the DMA source
    # for overflow blocks; the row mask below zeroes their contribution (and the
    # garbage rows of clipped edge blocks).
    bidx = c * nb_inner + i
    row_start = bidx * row_tile

    x = pred_ref[...].astype(jnp.float32)
    y = label_ref[...].astype(jnp.float32)

    # Numerically-stable BCE with logits (same form PyTorch uses).
    e = jnp.exp(-jnp.abs(x))                             # EUP #1
    bce = jnp.maximum(x, 0.0) - x * y + jnp.log1p(e)     # EUP #2 (log1p)
    pt = jnp.exp(-bce)                                   # EUP #3
    one_m_pt = 1.0 - pt

    g = float(gamma)
    if g == 2.0:
        w = jnp.square(one_m_pt)                         # VPU, no pow
    elif g == float(int(g)):
        w = lax.integer_pow(one_m_pt, int(g))            # VPU, no pow
    else:
        w = one_m_pt ** g                                # generic fallback
    focal = alpha * w * bce

    # Mask rows past the true batch size (edge / overflow blocks).
    rows = row_start + lax.broadcasted_iota(jnp.int32, focal.shape, 0)
    focal = jnp.where(rows < rows_valid, focal, 0.0)

    # Pure element-wise VPU accumulation; no per-step cross-lane reduction.
    acc_ref[...] += focal

    @pl.when(i == pl.num_programs(1) - 1)
    def _finish():
        partial = jnp.sum(acc_ref[...]) * inv_n          # one XLU reduce per core
        out_ref[...] = jnp.full(out_ref.shape, partial, dtype=jnp.float32)


def _row_align(dtype):
    # Sublane packing requirement for the second-minor block dim.
    return {4: 8, 2: 16, 1: 32}.get(jnp.dtype(dtype).itemsize, 8)


def focal_loss(predictions, labels, alpha=1.0, gamma=2.0, *,
               target_block_bytes=2 * 1024 * 1024, num_core_splits=2):
    """predictions: [B, S, 1] or [B, S] logits; labels: [B, S] in {0, 1}.

    Labels may be any dtype (bool/int8/bf16/f32); they are cast to f32 inside
    the kernel, so pass the narrowest storage dtype to minimize HBM traffic.
    """
    preds = predictions
    if preds.ndim == labels.ndim + 1 and preds.shape[-1] == 1:
        preds = preds[..., 0]           # squeeze the trailing singleton only
    if preds.ndim == 1:
        preds = preds[None, :]
        labels = labels[None, :]
    assert preds.ndim == 2 and preds.shape == labels.shape, (preds.shape, labels.shape)

    B, S = preds.shape
    n_elems = B * S

    align = max(_row_align(preds.dtype), _row_align(labels.dtype))
    if B < align:
        row_tile = B                    # full-dim block rows (always legal)
    else:
        rt = max(align, target_block_bytes // (4 * S))   # ~2 MiB per f32 block
        rt = (rt // align) * align
        row_tile = int(min(rt, (B // align) * align))

    nb = pl.cdiv(B, row_tile)                       # total row blocks
    nb_inner = pl.cdiv(nb, num_core_splits)         # row blocks per core split

    def in_map(c, i):
        # Clamp so overflow grid points never DMA out of bounds; their rows are
        # masked to zero inside the kernel.
        return (jnp.minimum(c * nb_inner + i, nb - 1), 0)

    kernel = functools.partial(
        _focal_loss_kernel,
        alpha=float(alpha), gamma=float(gamma),
        inv_n=1.0 / float(n_elems), rows_valid=B,
        row_tile=row_tile, nb_inner=nb_inner)

    partials = pl.pallas_call(
        kernel,
        out_shape=jax.ShapeDtypeStruct((num_core_splits, 8, 128), jnp.float32),
        grid_spec=pltpu.PrefetchScalarGridSpec(
            num_scalar_prefetch=0,
            grid=(num_core_splits, nb_inner),
            in_specs=[
                pl.BlockSpec((row_tile, S), in_map),
                pl.BlockSpec((row_tile, S), in_map),
            ],
            out_specs=pl.BlockSpec((1, 8, 128), lambda c, i: (c, 0, 0)),
            scratch_shapes=[pltpu.VMEM((row_tile, S), jnp.float32)],
        ),
        compiler_params=pltpu.CompilerParams(
            # outer axis -> both TensorCores on v7x; inner axis is the reduction
            dimension_semantics=("parallel", "arbitrary"),
            # 2 inputs x 2 buffers x ~2 MiB + accumulator << 32 MiB, which is
            # within the scoped budget on v5e/v6e/v7x.
            vmem_limit_bytes=32 * 1024 * 1024,
        ),
    )(preds, labels)

    return jnp.sum(partials[:, 0, 0])   # sum of per-core partial means == mean


def _focal_loss_ref(predictions, labels, alpha=1.0, gamma=2.0):
    x = predictions
    if x.ndim == labels.ndim + 1 and x.shape[-1] == 1:
        x = x[..., 0]
    x = x.astype(jnp.float32)
    y = labels.astype(jnp.float32)
    bce = jnp.maximum(x, 0.0) - x * y + jnp.log1p(jnp.exp(-jnp.abs(x)))
    pt = jnp.exp(-bce)
    return jnp.mean(alpha * (1.0 - pt) ** gamma * bce)


if __name__ == "__main__":
    key = jax.random.PRNGKey(0)
    k1, k2, k3, k4 = jax.random.split(key, 4)

    # Case 1: [B, S, 1] f32 logits, bf16 {0,1} labels (narrow storage dtype).
    B, S = 32, 256
    predictions = jax.random.normal(k1, (B, S, 1), dtype=jnp.float32)
    labels = (jax.random.uniform(k2, (B, S)) > 0.5).astype(jnp.bfloat16)

    out = jax.block_until_ready(focal_loss(predictions, labels, alpha=1.0, gamma=2.0))
    ref = _focal_loss_ref(predictions, labels, alpha=1.0, gamma=2.0)
    assert jnp.allclose(out, ref, atol=1e-5, rtol=1e-5), (out, ref)

    # Case 2: ragged batch (B not a multiple of the row tile), integer gamma=3.
    B2, S2 = 20, 256
    predictions2 = jax.random.normal(k3, (B2, S2), dtype=jnp.float32)
    labels2 = (jax.random.uniform(k4, (B2, S2)) > 0.5).astype(jnp.float32)

    out2 = jax.block_until_ready(focal_loss(predictions2, labels2, alpha=0.25, gamma=3.0))
    ref2 = _focal_loss_ref(predictions2, labels2, alpha=0.25, gamma=3.0)
    assert jnp.allclose(out2, ref2, atol=1e-5, rtol=1e-5), (out2, ref2)

    print("KERNEL_OK")
</pallas_src>

<mosaic_0001>
module attributes {stable_mosaic.version = 11 : i64} {
  func.func @_focal_loss_kernel(%arg0: i32, %arg1: i32, %arg2: memref<32x256xf32, #tpu.memory_space<vmem>>, %arg3: memref<32x256xbf16, #tpu.memory_space<vmem>>, %arg4: memref<1x8x128xf32, #tpu.memory_space<vmem>>, %arg5: memref<32x256xf32, #tpu.memory_space<vmem>>) attributes {dimension_semantics = [#tpu.dimension_semantics<parallel>, #tpu.dimension_semantics<arbitrary>], iteration_bounds = array<i64: 2, 1>, scalar_prefetch = 0 : i64, scratch_operands = 1 : i64, tpu.core_type = #tpu.core_type<tc>, window_params = [{transform_indices = @transform_0, window_bounds = array<i64: 32, 256>}, {transform_indices = @transform_1, window_bounds = array<i64: 32, 256>}, {transform_indices = @transform_2, window_bounds = array<i64: 1, 8, 128>}]} {
    %c0_i32 = arith.constant 0 : i32
    %0 = arith.cmpi eq, %arg1, %c0_i32 : i32
    %1 = arith.extui %0 : i1 to i32
    %c0_i32_0 = arith.constant 0 : i32
    %2 = arith.cmpi ne, %1, %c0_i32_0 : i32
    scf.if %2 {
      %cst_16 = arith.constant 0.000000e+00 : f32
      %41 = vector.broadcast %cst_16 : f32 to vector<32x256xf32>
      %c0_17 = arith.constant 0 : index
      %c0_18 = arith.constant 0 : index
      %42 = vector.load %arg5[%c0_17, %c0_18] : memref<32x256xf32, #tpu.memory_space<vmem>>, vector<32x256xf32>
      tpu.vector_store %arg5[%c0_17, %c0_18], %41 {strides = array<i32>} : memref<32x256xf32, #tpu.memory_space<vmem>>, vector<32x256xf32>,
    } else {
    }
    %c1_i32 = arith.constant 1 : i32
    %3 = arith.muli %arg0, %c1_i32 : i32
    %4 = arith.addi %3, %arg1 : i32
    %c32_i32 = arith.constant 32 : i32
    %5 = arith.muli %4, %c32_i32 : i32
    %c0 = arith.constant 0 : index
    %c0_1 = arith.constant 0 : index
    %6 = vector.load %arg2[%c0, %c0_1] : memref<32x256xf32, #tpu.memory_space<vmem>>, vector<32x256xf32>
    %c0_2 = arith.constant 0 : index
    %c0_3 = arith.constant 0 : index
    %7 = vector.load %arg3[%c0_2, %c0_3] : memref<32x256xbf16, #tpu.memory_space<vmem>>, vector<32x256xbf16>
    %8 = arith.extf %7 : vector<32x256xbf16> to vector<32x256xf32>
    %9 = math.absf %6 : vector<32x256xf32>
    %cst = arith.constant 0.000000e+00 : f32
    %10 = vector.broadcast %cst : f32 to vector<32x256xf32>
    %11 = arith.subf %10, %9 : vector<32x256xf32>
    %12 = math.exp %11 : vector<32x256xf32>
    %cst_4 = arith.constant 0.000000e+00 : f32
    %13 = vector.broadcast %cst_4 : f32 to vector<32x256xf32>
    %14 = arith.maximumf %6, %13 : vector<32x256xf32>
    %15 = arith.mulf %6, %8 : vector<32x256xf32>
    %16 = arith.subf %14, %15 : vector<32x256xf32>
    %17 = math.log1p %12 : vector<32x256xf32>
    %18 = arith.addf %16, %17 : vector<32x256xf32>
    %cst_5 = arith.constant 0.000000e+00 : f32
    %19 = vector.broadcast %cst_5 : f32 to vector<32x256xf32>
    %20 = arith.subf %19, %18 : vector<32x256xf32>
    %21 = math.exp %20 : vector<32x256xf32>
    %cst_6 = arith.constant 1.000000e+00 : f32
    %22 = vector.broadcast %cst_6 : f32 to vector<32x256xf32>
    %23 = arith.subf %22, %21 : vector<32x256xf32>
    %24 = arith.mulf %23, %23 : vector<32x256xf32>
    %cst_7 = arith.constant 1.000000e+00 : f32
    %25 = vector.broadcast %cst_7 : f32 to vector<32x256xf32>
    %26 = arith.mulf %25, %24 : vector<32x256xf32>
    %27 = arith.mulf %26, %18 : vector<32x256xf32>
    %28 = tpu.iota {dimensions = array<i32: 0>} : vector<32x256xi32>
    %29 = vector.broadcast %5 : i32 to vector<32x256xi32>
    %30 = arith.addi %29, %28 : vector<32x256xi32>
    %c32_i32_8 = arith.constant 32 : i32
    %31 = vector.broadcast %c32_i32_8 : i32 to vector<32x256xi32>
    %32 = arith.cmpi slt, %30, %31 : vector<32x256xi32>
    %cst_9 = arith.constant 0.000000e+00 : f32
    %33 = vector.broadcast %cst_9 : f32 to vector<32x256xf32>
    %34 = arith.select %32, %27, %33 : vector<32x256xi1>, vector<32x256xf32>
    %c0_10 = arith.constant 0 : index
    %c0_11 = arith.constant 0 : index
    %35 = vector.load %arg5[%c0_10, %c0_11] : memref<32x256xf32, #tpu.memory_space<vmem>>, vector<32x256xf32>
    %36 = arith.addf %35, %34 : vector<32x256xf32>
    %c0_12 = arith.constant 0 : index
    %c0_13 = arith.constant 0 : index
    %37 = vector.load %arg5[%c0_12, %c0_13] : memref<32x256xf32, #tpu.memory_space<vmem>>, vector<32x256xf32>
    tpu.vector_store %arg5[%c0_12, %c0_13], %36 {strides = array<i32>} : memref<32x256xf32, #tpu.memory_space<vmem>>, vector<32x256xf32>,
    %c0_i32_14 = arith.constant 0 : i32
    %38 = arith.cmpi eq, %arg1, %c0_i32_14 : i32
    %39 = arith.extui %38 : i1 to i32
    %c0_i32_15 = arith.constant 0 : i32
    %40 = arith.cmpi ne, %39, %c0_i32_15 : i32
    scf.if %40 {
      %c0_16 = arith.constant 0 : index
      %c0_17 = arith.constant 0 : index
      %41 = vector.load %arg5[%c0_16, %c0_17] : memref<32x256xf32, #tpu.memory_space<vmem>>, vector<32x256xf32>
      %42 = vector.shape_cast %41 : vector<32x256xf32> to vector<1x32x256xf32>
      %cst_18 = arith.constant dense<0.000000e+00> : vector<1xf32>
      %43 = vector.multi_reduction <add>, %42, %cst_18 [1, 2] : vector<1x32x256xf32> to vector<1xf32>
      %44 = vector.shape_cast %43 : vector<1xf32> to vector<1x1x1xf32>
      %45 = vector.extract %44[0, 0, 0] : f32 from vector<1x1x1xf32>
      %cst_19 = arith.constant 1.22070313E-4 : f32
      %46 = arith.mulf %45, %cst_19 : f32
      %47 = vector.broadcast %46 : f32 to vector<1x8x128xf32>
      %c0_20 = arith.constant 0 : index
      %c0_21 = arith.constant 0 : index
      %c0_22 = arith.constant 0 : index
      %48 = vector.load %arg4[%c0_20, %c0_21, %c0_22] : memref<1x8x128xf32, #tpu.memory_space<vmem>>, vector<1x8x128xf32>
      tpu.vector_store %arg4[%c0_20, %c0_21, %c0_22], %47 {strides = array<i32>} : memref<1x8x128xf32, #tpu.memory_space<vmem>>, vector<1x8x128xf32>,
    } else {
    }
    return
  }
  func.func @transform_0(%arg0: i32, %arg1: i32) -> (i32, i32) {
    %c1_i32 = arith.constant 1 : i32
    %0 = arith.muli %arg0, %c1_i32 : i32
    %1 = arith.addi %0, %arg1 : i32
    %c0_i32 = arith.constant 0 : i32
    %2 = arith.minsi %1, %c0_i32 : i32
    %c0_i32_0 = arith.constant 0 : i32
    %c0_i32_1 = arith.constant 0 : i32
    return %2, %c0_i32_0 : i32, i32
  }
  func.func @transform_1(%arg0: i32, %arg1: i32) -> (i32, i32) {
    %c1_i32 = arith.constant 1 : i32
    %0 = arith.muli %arg0, %c1_i32 : i32
    %1 = arith.addi %0, %arg1 : i32
    %c0_i32 = arith.constant 0 : i32
    %2 = arith.minsi %1, %c0_i32 : i32
    %c0_i32_0 = arith.constant 0 : i32
    %c0_i32_1 = arith.constant 0 : i32
    return %2, %c0_i32_0 : i32, i32
  }
  func.func @transform_2(%arg0: i32, %arg1: i32) -> (i32, i32, i32) {
    %c0_i32 = arith.constant 0 : i32
    %c0_i32_0 = arith.constant 0 : i32
    %c0_i32_1 = arith.constant 0 : i32
    return %arg0, %c0_i32, %c0_i32_0 : i32, i32, i32
  }
}

</mosaic_0001>

<llo_original>
// kernel: tpu_custom_call.1
$region0: #{tpu_custom_call.1}
  #allocation0 [shape = 'u32[]', space=smem, size = 0x4, offset = 0x4, fixed_abs, tag = 'smem constant byte address 0x4 - core index']
  #allocation1 [shape = 'u32[72,128]{1,0:T(1,128)}', space=vmem, size = 0x9000, scoped, tag = 'internal scratch']
  #allocation2 [shape = 'f32[32,256]{1,0:T(8,128)}', space=vmem, size = 0x8000, scoped, tag = 'scratch operand']
  %s0 = inlined_call_operand.hbm [shape: f32[32,256], index: 0, kind: input, shape index: {}]
  %s1 = inlined_call_operand.hbm [shape: bf16[32,256], index: 1, kind: input, shape index: {}]
  %s2 = inlined_call_operand.hbm [shape: f32[2,8,128], index: 2, kind: output, shape index: {}]
  %s3 = sld [smem:[#allocation0]]
  $region57: #{tpu_custom_call.1} parent=0
    _
  %s5 = ssub.s32 1, %s3
  %s6 = scalar_select 0, %s5, %s3
  $region1: #{tpu_custom_call.1} parent=0
    #allocation3 [shape = 'u8[65536]{0}', space=vmem, size = 0x10000, scoped, tag = 'input window, operand 0']
    #allocation4 [shape = 's32[2]{0}', space=sflag, size = 0x8, scoped, tag = 'scoped memory for tpu_custom_call.1']
    #allocation5 [shape = 's32[2]{0}', space=sflag, size = 0x8, scoped, tag = 'scoped memory for tpu_custom_call.1']
    #allocation6 [shape = 'u8[32768]{0}', space=vmem, size = 0x8000, scoped, tag = 'input window, operand 1']
    #allocation7 [shape = 's32[2]{0}', space=sflag, size = 0x8, scoped, tag = 'scoped memory for tpu_custom_call.1']
    #allocation8 [shape = 'u8[8192]{0}', space=vmem, size = 0x2000, scoped, tag = 'output window, operand 0']
    %7 = vsyncpa [#allocation4], 0
    %s8 = scalar_lea.sflag [#allocation4], 1
    %9 = vsyncpa %s8, 0
    %10 = vsyncpa [#allocation7], 0
    %s11 = scalar_lea.sflag [#allocation7], 1
    %12 = vsyncpa %s11, 0
    %13 = vsyncpa [#allocation5], 0
    %s14 = scalar_lea.sflag [#allocation5], 1
    %15 = vsyncpa %s14, 0
    loop: start=0, step=1, limit=4
    $region2: #{tpu_custom_call.1} parent=1 // loop_pre_header
      _
    $region3: #{tpu_custom_call.1} parent=1 // loop_header
      %s17 = sphi 0, %s21
      %p18 = scmp.ge.s32.totalorder %s17, 4
      %s24 = sphi 0, %s36
      %s25 = sphi 0, %s32
      %s26 = sphi 0, %s24
      %s27 = sphi 0, %s25
      %s28 = sphi 0, %s26
      %s29 = sphi 0, %s27
      %s45 = sphi 0, %s47
      %s48 = sphi 0, %s45
      %s49 = sphi 0, %s48
      %s65 = sphi 0, %s49
      %s77 = sphi 0, %s79
      %s80 = sphi 0, %s77
      %s81 = sphi 0, %s80
      %s97 = sphi 0, %s81
      %s103 = sphi 0, %s105
      %s106 = sphi 0, %s103
      %s107 = sphi 0, %s106
      %s123 = sphi 0, %s107
    $region4: #{tpu_custom_call.1} parent=1 // loop_header_branch
      %20 = sbr.rel (%p18) target = $region8
    $region5: #{tpu_custom_call.1} parent=1 // loop_body
      %s22 = ssub.s32 %s17, 1
      %s23 = ssub.s32 %s17, 2
      %s30 = sadd.s32 1, %s25
      %p31 = scmp.ge.s32.totalorder %s30, 1
      %s32 = scalar_select %p31, 0, %s30
      %s33 = sadd.s32 1, %s24
      %s34 = scalar_select %p31, %s33, %s24
      %p35 = scmp.ge.s32.totalorder %s34, 2
      %s36 = scalar_select %p35, 0, %s34
      %s37 = sadd.s32 %s24, %s25
      %p38 = scmp.lt.s32.totalorder %s37, 0
      %s39 = scalar_select %p38, %s37, 0
      %s40 = sadd.s32 %s36, %s32
      %p41 = scmp.lt.s32.totalorder %s40, 0
      %s42 = scalar_select %p41, %s40, 0
      %s43 = ssub.s32 %s39, %s42
      %p44 = scmp.eq.s32.totalorder %s43, 0
      %s46 = sadd.s32 %s45, 1
      %s47 = scalar_select %p44, %s45, %s46
      %p50 = pneg %p44
      %p51 = scmp.eq.s32.totalorder %s17, 1
      %p52 = por %p50, %p51
      %p53 = scmp.ne.s32.totalorder %s45, %s48
      %p54 = scmp.eq.s32.totalorder %s17, 0
      %p55 = por %p53, %p54
      %p56 = scmp.ne.s32.totalorder %s45, %s48
      %p57 = scmp.eq.s32.totalorder %s22, 1
      %p58 = por %p56, %p57
      %p59 = scmp.ne.s32.totalorder %s48, %s49
      %p60 = scmp.eq.s32.totalorder %s22, 0
      %p61 = por %p59, %p60
      %p62 = scmp.ne.s32.totalorder %s48, %s49
      %p63 = scmp.eq.s32.totalorder %s23, 1
      %p64 = por %p62, %p63
      %p66 = scmp.ne.s32.totalorder %s49, %s65
      %p67 = scmp.eq.s32.totalorder %s23, 0
      %p68 = por %p66, %p67
      %s69 = sadd.s32 %s24, %s25
      %p70 = scmp.lt.s32.totalorder %s69, 0
      %s71 = scalar_select %p70, %s69, 0
      %s72 = sadd.s32 %s36, %s32
      %p73 = scmp.lt.s32.totalorder %s72, 0
      %s74 = scalar_select %p73, %s72, 0
      %s75 = ssub.s32 %s71, %s74
      %p76 = scmp.eq.s32.totalorder %s75, 0
      %s78 = sadd.s32 %s77, 1
      %s79 = scalar_select %p76, %s77, %s78
      %p82 = pneg %p76
      %p83 = scmp.eq.s32.totalorder %s17, 1
      %p84 = por %p82, %p83
      %p85 = scmp.ne.s32.totalorder %s77, %s80
      %p86 = scmp.eq.s32.totalorder %s17, 0
      %p87 = por %p85, %p86
      %p88 = scmp.ne.s32.totalorder %s77, %s80
      %p89 = scmp.eq.s32.totalorder %s22, 1
      %p90 = por %p88, %p89
      %p91 = scmp.ne.s32.totalorder %s80, %s81
      %p92 = scmp.eq.s32.totalorder %s22, 0
      %p93 = por %p91, %p92
      %p94 = scmp.ne.s32.totalorder %s80, %s81
      %p95 = scmp.eq.s32.totalorder %s23, 1
      %p96 = por %p94, %p95
      %p98 = scmp.ne.s32.totalorder %s81, %s97
      %p99 = scmp.eq.s32.totalorder %s23, 0
      %p100 = por %p98, %p99
      %s101 = ssub.s32 %s24, %s36
      %p102 = scmp.eq.s32.totalorder %s101, 0
      %s104 = sadd.s32 %s103, 1
      %s105 = scalar_select %p102, %s103, %s104
      %p108 = pneg %p102
      %p109 = scmp.eq.s32.totalorder %s17, 1
      %p110 = por %p108, %p109
      %p111 = scmp.ne.s32.totalorder %s103, %s106
      %p112 = scmp.eq.s32.totalorder %s17, 0
      %p113 = por %p111, %p112
      %p114 = scmp.ne.s32.totalorder %s103, %s106
      %p115 = scmp.eq.s32.totalorder %s22, 1
      %p116 = por %p114, %p115
      %p117 = scmp.ne.s32.totalorder %s106, %s107
      %p118 = scmp.eq.s32.totalorder %s22, 0
      %p119 = por %p117, %p118
      %p120 = scmp.ne.s32.totalorder %s106, %s107
      %p121 = scmp.eq.s32.totalorder %s23, 1
      %p122 = por %p120, %p121
      %p124 = scmp.ne.s32.totalorder %s107, %s123
      %p125 = scmp.eq.s32.totalorder %s23, 0
      %p126 = por %p124, %p125
      %p127 = scmp.le.s32.totalorder 1, %s17
      %p128 = scmp.lt.s32.totalorder %s17, 3
      %p129 = pnand %p127, %p128
      %p130 = pneg %p129
      // Predicated region
      $region9: #{tpu_custom_call.1} parent=5 // pred_check
        _
      $region10: #{tpu_custom_call.1} parent=5 // pred_check_branch
        %132 = sbr.rel (%p129) target = $region12
      $region11: #{tpu_custom_call.1} parent=5 // pred_region
        %s133 = ssub.s32 %s17, 1
      $region12: #{tpu_custom_call.1} parent=5 // pred_fallthru
        _
      %p134 = scmp.lt.s32.totalorder %s17, 2
      // Predicated region
      $region13: #{tpu_custom_call.1} parent=5 // pred_check
        %p135 = pneg %p134
      $region14: #{tpu_custom_call.1} parent=5 // pred_check_branch
        %137 = sbr.rel (%p135) target = $region16
      $region15: #{tpu_custom_call.1} parent=5 // pred_region
        // Predicated region
        $region17: #{tpu_custom_call.1} parent=15 // pred_check
          %p138 = pneg %p55
        $region18: #{tpu_custom_call.1} parent=15 // pred_check_branch
          %140 = sbr.rel (%p138) target = $region20
        $region19: #{tpu_custom_call.1} parent=15 // pred_region
          %s141 = sand.u32 %s45, 1
          %s142 = scalar_lea.sflag [#allocation4], %s141
          %s143 = sand.u32 %s45, 1
          %s144 = smul.addr %s143, 64
          %s145 = scalar_lea.vmem [#allocation3], %s144
          %s146 = sadd.s32 %s24, %s25
          %p147 = scmp.lt.s32.totalorder %s146, 0
          %s148 = scalar_select %p147, %s146, 0
          %s149 = smul.u32 4, %s148
          %151 = vsyncadd %s142, 0
          %s152 = smul.addr %s149, 2
          %s153 = smul.addr %s152, 8
          %s154 = scalar_lea.hbm %s0, %s153
          %s155 = sshll.u32 %s154, 4
          %s156 = int_to_ptr.hbm [resolvable:$true] %s155
          %s157 = sshll.u32 %s145, 4
          %s158 = int_to_ptr.vmem [resolvable:$true] %s157
          %163 = dma.hbm_to_vmem [thread:$0]  %s156, 1024, %s158, %s142, 256, 256, 16
        $region20: #{tpu_custom_call.1} parent=15 // pred_fallthru
          _
        // Predicated region
        $region21: #{tpu_custom_call.1} parent=15 // pred_check
          %p164 = pneg %p87
        $region22: #{tpu_custom_call.1} parent=15 // pred_check_branch
          %166 = sbr.rel (%p164) target = $region24
        $region23: #{tpu_custom_call.1} parent=15 // pred_region
          %s167 = sand.u32 %s77, 1
          %s168 = scalar_lea.sflag [#allocation7], %s167
          %s169 = sand.u32 %s77, 1
          %s170 = smul.addr %s169, 32
          %s171 = scalar_lea.vmem [#allocation6], %s170
          %s172 = sadd.s32 %s24, %s25
          %p173 = scmp.lt.s32.totalorder %s172, 0
          %s174 = scalar_select %p173, %s172, 0
          %s175 = smul.u32 4, %s174
          %177 = vsyncadd %s168, 0
          %s178 = smul.addr %s175, 2
          %s179 = smul.addr %s178, 4
          %s180 = scalar_lea.hbm %s1, %s179
          %s181 = sshll.u32 %s180, 4
          %s182 = int_to_ptr.hbm [resolvable:$true] %s181
          %s183 = sshll.u32 %s171, 4
          %s184 = int_to_ptr.vmem [resolvable:$true] %s183
          %189 = dma.hbm_to_vmem [thread:$0]  %s182, 512, %s184, %s168, 128, 128, 8
        $region24: #{tpu_custom_call.1} parent=15 // pred_fallthru
          _
      $region16: #{tpu_custom_call.1} parent=5 // pred_fallthru
        _
      %p190 = scmp.le.s32.totalorder 1, %s17
      %p191 = scmp.lt.s32.totalorder %s17, 3
      %p192 = pnand %p190, %p191
      %p193 = pneg %p192
      // Predicated region
      $region25: #{tpu_custom_call.1} parent=5 // pred_check
        _
      $region26: #{tpu_custom_call.1} parent=5 // pred_check_branch
        %195 = sbr.rel (%p192) target = $region28
      $region27: #{tpu_custom_call.1} parent=5 // pred_region
        %s196 = ssub.s32 %s17, 1
        %s197 = sand.u32 %s48, 1
        %s198 = scalar_lea.sflag [#allocation4], %s197
        %s199 = sand.u32 %s48, 1
        %s200 = smul.addr %s199, 64
        %s201 = scalar_lea.vmem [#allocation3], %s200
        // Predicated region
        $region29: #{tpu_custom_call.1} parent=27 // pred_check
          %p202 = pneg %p61
        $region30: #{tpu_custom_call.1} parent=27 // pred_check_branch
          %204 = sbr.rel (%p202) target = $region32
        $region31: #{tpu_custom_call.1} parent=27 // pred_region
          %206 = dma.done %s198, 1024
        $region32: #{tpu_custom_call.1} parent=27 // pred_fallthru
          _
        %s207 = sand.u32 %s80, 1
        %s208 = scalar_lea.sflag [#allocation7], %s207
        %s209 = sand.u32 %s80, 1
        %s210 = smul.addr %s209, 32
        %s211 = scalar_lea.vmem [#allocation6], %s210
        // Predicated region
        $region33: #{tpu_custom_call.1} parent=27 // pred_check
          %p212 = pneg %p93
        $region34: #{tpu_custom_call.1} parent=27 // pred_check_branch
          %214 = sbr.rel (%p212) target = $region36
        $region35: #{tpu_custom_call.1} parent=27 // pred_region
          %216 = dma.done %s208, 512
        $region36: #{tpu_custom_call.1} parent=27 // pred_fallthru
          _
        %s217 = sand.u32 %s48, 1
        %s218 = scalar_lea.sflag [#allocation4], %s217
        %s219 = sand.u32 %s48, 1
        %s220 = smul.addr %s219, 64
        %s221 = scalar_lea.vmem [#allocation3], %s220
        %p222 = pneg %p61
        %p223 = pneg %p58
        %s224 = sand.u32 %s80, 1
        %s225 = scalar_lea.sflag [#allocation7], %s224
        %s226 = sand.u32 %s80, 1
        %s227 = smul.addr %s226, 32
        %s228 = scalar_lea.vmem [#allocation6], %s227
        %p229 = pneg %p93
        %p230 = pneg %p90
        %p231 = pneg %p119
        %p232 = pneg %p116
        %s233 = sand.u32 %s106, 1
        %s234 = scalar_lea.sflag [#allocation5], %s233
        %s235 = sand.u32 %s106, 1
        %s236 = smul.addr %s235, 8
        %s237 = scalar_lea.vmem [#allocation8], %s236
        %s238 = sadd.s32 %s26, %s27
        %p239 = scmp.lt.s32.totalorder %s238, 0
        %s240 = scalar_select %p239, %s238, 0
        %s241 = smul.u32 4, %s240
        %s242 = sadd.s32 %s26, %s27
        %p243 = scmp.lt.s32.totalorder %s242, 0
        %s244 = scalar_select %p243, %s242, 0
        %s245 = smul.u32 4, %s244
        %p246 = scmp.eq.s32.totalorder %s27, 0
        // Predicated region
        $region37: #{tpu_custom_call.1} parent=27 // pred_check
          %p247 = pneg %p246
        $region38: #{tpu_custom_call.1} parent=27 // pred_check_branch
          %249 = sbr.rel (%p247) target = $region40
        $region39: #{tpu_custom_call.1} parent=27 // pred_region
          %250 = vst [vmem:[#allocation2] sm:$0xff] 0.0
          %251 = vst [vmem:[#allocation2 + $0x8] sm:$0xff] 0.0
          %252 = vst [vmem:[#allocation2 + $0x10] sm:$0xff] 0.0
          %253 = vst [vmem:[#allocation2 + $0x18] sm:$0xff] 0.0
          %254 = vst [vmem:[#allocation2 + $0x20] sm:$0xff] 0.0
          %255 = vst [vmem:[#allocation2 + $0x28] sm:$0xff] 0.0
          %256 = vst [vmem:[#allocation2 + $0x30] sm:$0xff] 0.0
          %257 = vst [vmem:[#allocation2 + $0x38] sm:$0xff] 0.0
        $region40: #{tpu_custom_call.1} parent=27 // pred_fallthru
          _
        %s258 = sadd.s32 %s26, %s27
        %s259 = smul.u32 %s258, 32
        %v260 = vld [vmem:[%s201] sm:$0xff]
        %v261 = vld [vmem:[%s201 + $0x8] sm:$0xff]
        %v262 = vld [vmem:[%s201 + $0x10] sm:$0xff]
        %v263 = vld [vmem:[%s201 + $0x18] sm:$0xff]
        %v264 = vld [vmem:[%s201 + $0x20] sm:$0xff]
        %v265 = vld [vmem:[%s201 + $0x28] sm:$0xff]
        %v266 = vld [vmem:[%s201 + $0x30] sm:$0xff]
        %v267 = vld [vmem:[%s201 + $0x38] sm:$0xff]
        %v268 = vld [vmem:[%s211] sm:$0xff]
        %v269 = vld [vmem:[%s211 + $0x8] sm:$0xff]
        %v270 = vld [vmem:[%s211 + $0x10] sm:$0xff]
        %v271 = vld [vmem:[%s211 + $0x18] sm:$0xff]
        %v272 = vunpack.c.l.bf16 %v268
        %v273 = vunpack.c.h.bf16 %v268
        %v274 = vunpack.c.l.bf16 %v269
        %v275 = vunpack.c.h.bf16 %v269
        %v276 = vunpack.c.l.bf16 %v270
        %v277 = vunpack.c.h.bf16 %v270
        %v278 = vunpack.c.l.bf16 %v271
        %v279 = vunpack.c.h.bf16 %v271
        %v280 = vand.u32 2147483647, %v260
        %v281 = vand.u32 2147483647, %v261
        %v282 = vand.u32 2147483647, %v262
        %v283 = vand.u32 2147483647, %v263
        %v284 = vand.u32 2147483647, %v264
        %v285 = vand.u32 2147483647, %v265
        %v286 = vand.u32 2147483647, %v266
        %v287 = vand.u32 2147483647, %v267
        %v288 = vsub.f32 0.0, %v280
        %v289 = vsub.f32 0.0, %v281
        %v290 = vsub.f32 0.0, %v282
        %v291 = vsub.f32 0.0, %v283
        %v292 = vsub.f32 0.0, %v284
        %v293 = vsub.f32 0.0, %v285
        %v294 = vsub.f32 0.0, %v286
        %v295 = vsub.f32 0.0, %v287
        %v296 = vmul.f32 %v288, 1.442695
        %v297 = vpow.pop %v296
        %v298 = vmul.f32 %v289, 1.442695
        %v299 = vpow.pop %v298
        %v300 = vmul.f32 %v290, 1.442695
        %v301 = vpow.pop %v300
        %v302 = vmul.f32 %v291, 1.442695
        %v303 = vpow.pop %v302
        %v304 = vmul.f32 %v292, 1.442695
        %v305 = vpow.pop %v304
        %v306 = vmul.f32 %v293, 1.442695
        %v307 = vpow.pop %v306
        %v308 = vmul.f32 %v294, 1.442695
        %v309 = vpow.pop %v308
        %v310 = vmul.f32 %v295, 1.442695
        %v311 = vpow.pop %v310
        %v312 = vmax.f32 %v260, 0.0
        %v313 = vmax.f32 %v261, 0.0
        %v314 = vmax.f32 %v262, 0.0
        %v315 = vmax.f32 %v263, 0.0
        %v316 = vmax.f32 %v264, 0.0
        %v317 = vmax.f32 %v265, 0.0
        %v318 = vmax.f32 %v266, 0.0
        %v319 = vmax.f32 %v267, 0.0
        %v320 = vmul.f32 %v260, %v272
        %v321 = vmul.f32 %v261, %v273
        %v322 = vmul.f32 %v262, %v274
        %v323 = vmul.f32 %v263, %v275
        %v324 = vmul.f32 %v264, %v276
        %v325 = vmul.f32 %v265, %v277
        %v326 = vmul.f32 %v266, %v278
        %v327 = vmul.f32 %v267, %v279
        %v328 = vsub.f32 %v312, %v320
        %v329 = vsub.f32 %v313, %v321
        %v330 = vsub.f32 %v314, %v322
        %v331 = vsub.f32 %v315, %v323
        %v332 = vsub.f32 %v316, %v324
        %v333 = vsub.f32 %v317, %v325
        %v334 = vsub.f32 %v318, %v326
        %v335 = vsub.f32 %v319, %v327
        %v336 = vadd.f32 %v297, 1.0
        %v337 = vlog2.pop %v336
        %v338 = vmul.f32 %v337, 0.6931472
        %v339 = vmul.f32 -0.5, %v297
        %v340 = vadd.f32 %v339, 1.0
        %v341 = vmul.f32 %v340, %v297
        %v342 = vand.u32 2147483647, %v297
        %vm343 = vcmp.lt.f32.partialorder %v342, 0.0004427343
        %v344 = vsel %vm343, %v341, %v338
        %v345 = vadd.f32 %v299, 1.0
        %v346 = vlog2.pop %v345
        %v347 = vmul.f32 %v346, 0.6931472
        %v348 = vmul.f32 -0.5, %v299
        %v349 = vadd.f32 %v348, 1.0
        %v350 = vmul.f32 %v349, %v299
        %v351 = vand.u32 2147483647, %v299
        %vm352 = vcmp.lt.f32.partialorder %v351, 0.0004427343
        %v353 = vsel %vm352, %v350, %v347
        %v354 = vadd.f32 %v301, 1.0
        %v355 = vlog2.pop %v354
        %v356 = vmul.f32 %v355, 0.6931472
        %v357 = vmul.f32 -0.5, %v301
        %v358 = vadd.f32 %v357, 1.0
        %v359 = vmul.f32 %v358, %v301
        %v360 = vand.u32 2147483647, %v301
        %vm361 = vcmp.lt.f32.partialorder %v360, 0.0004427343
        %v362 = vsel %vm361, %v359, %v356
        %v363 = vadd.f32 %v303, 1.0
        %v364 = vlog2.pop %v363
        %v365 = vmul.f32 %v364, 0.6931472
        %v366 = vmul.f32 -0.5, %v303
        %v367 = vadd.f32 %v366, 1.0
        %v368 = vmul.f32 %v367, %v303
        %v369 = vand.u32 2147483647, %v303
        %vm370 = vcmp.lt.f32.partialorder %v369, 0.0004427343
        %v371 = vsel %vm370, %v368, %v365
        %v372 = vadd.f32 %v305, 1.0
        %v373 = vlog2.pop %v372
        %v374 = vmul.f32 %v373, 0.6931472
        %v375 = vmul.f32 -0.5, %v305
        %v376 = vadd.f32 %v375, 1.0
        %v377 = vmul.f32 %v376, %v305
        %v378 = vand.u32 2147483647, %v305
        %vm379 = vcmp.lt.f32.partialorder %v378, 0.0004427343
        %v380 = vsel %vm379, %v377, %v374
        %v381 = vadd.f32 %v307, 1.0
        %v382 = vlog2.pop %v381
        %v383 = vmul.f32 %v382, 0.6931472
        %v384 = vmul.f32 -0.5, %v307
        %v385 = vadd.f32 %v384, 1.0
        %v386 = vmul.f32 %v385, %v307
        %v387 = vand.u32 2147483647, %v307
        %vm388 = vcmp.lt.f32.partialorder %v387, 0.0004427343
        %v389 = vsel %vm388, %v386, %v383
        %v390 = vadd.f32 %v309, 1.0
        %v391 = vlog2.pop %v390
        %v392 = vmul.f32 %v391, 0.6931472
        %v393 = vmul.f32 -0.5, %v309
        %v394 = vadd.f32 %v393, 1.0
        %v395 = vmul.f32 %v394, %v309
        %v396 = vand.u32 2147483647, %v309
        %vm397 = vcmp.lt.f32.partialorder %v396, 0.0004427343
        %v398 = vsel %vm397, %v395, %v392
        %v399 = vadd.f32 %v311, 1.0
        %v400 = vlog2.pop %v399
        %v401 = vmul.f32 %v400, 0.6931472
        %v402 = vmul.f32 -0.5, %v311
        %v403 = vadd.f32 %v402, 1.0
        %v404 = vmul.f32 %v403, %v311
        %v405 = vand.u32 2147483647, %v311
        %vm406 = vcmp.lt.f32.partialorder %v405, 0.0004427343
        %v407 = vsel %vm406, %v404, %v401
        %v408 = vadd.f32 %v328, %v344
        %v409 = vadd.f32 %v329, %v353
        %v410 = vadd.f32 %v330, %v362
        %v411 = vadd.f32 %v331, %v371
        %v412 = vadd.f32 %v332, %v380
        %v413 = vadd.f32 %v333, %v389
        %v414 = vadd.f32 %v334, %v398
        %v415 = vadd.f32 %v335, %v407
        %v416 = vsub.f32 0.0, %v408
        %v417 = vsub.f32 0.0, %v409
        %v418 = vsub.f32 0.0, %v410
        %v419 = vsub.f32 0.0, %v411
        %v420 = vsub.f32 0.0, %v412
        %v421 = vsub.f32 0.0, %v413
        %v422 = vsub.f32 0.0, %v414
        %v423 = vsub.f32 0.0, %v415
        %v424 = vmul.f32 %v416, 1.442695
        %v425 = vpow.pop %v424
        %v426 = vmul.f32 %v417, 1.442695
        %v427 = vpow.pop %v426
        %v428 = vmul.f32 %v418, 1.442695
        %v429 = vpow.pop %v428
        %v430 = vmul.f32 %v419, 1.442695
        %v431 = vpow.pop %v430
        %v432 = vmul.f32 %v420, 1.442695
        %v433 = vpow.pop %v432
        %v434 = vmul.f32 %v421, 1.442695
        %v435 = vpow.pop %v434
        %v436 = vmul.f32 %v422, 1.442695
        %v437 = vpow.pop %v436
        %v438 = vmul.f32 %v423, 1.442695
        %v439 = vpow.pop %v438
        %v440 = vsub.f32 1.0, %v425
        %v441 = vsub.f32 1.0, %v427
        %v442 = vsub.f32 1.0, %v429
        %v443 = vsub.f32 1.0, %v431
        %v444 = vsub.f32 1.0, %v433
        %v445 = vsub.f32 1.0, %v435
        %v446 = vsub.f32 1.0, %v437
        %v447 = vsub.f32 1.0, %v439
        %v448 = vmul.f32 %v440, %v440
        %v449 = vmul.f32 %v441, %v441
        %v450 = vmul.f32 %v442, %v442
        %v451 = vmul.f32 %v443, %v443
        %v452 = vmul.f32 %v444, %v444
        %v453 = vmul.f32 %v445, %v445
        %v454 = vmul.f32 %v446, %v446
        %v455 = vmul.f32 %v447, %v447
        %v456 = vmul.f32 %v448, %v408
        %v457 = vmul.f32 %v449, %v409
        %v458 = vmul.f32 %v450, %v410
        %v459 = vmul.f32 %v451, %v411
        %v460 = vmul.f32 %v452, %v412
        %v461 = vmul.f32 %v453, %v413
        %v462 = vmul.f32 %v454, %v414
        %v463 = vmul.f32 %v455, %v415
        %v464 = vlaneseq
        %v465 = vshrl.u32 %v464, 7
        %v466 = vadd.s32 %v465, 8
        %v467 = vadd.s32 %v465, 16
        %v468 = vadd.s32 %v465, 24
        %v469 = vstv %s259
        %v470 = vadd.s32 %v469, %v465
        %v471 = vadd.s32 %v469, %v466
        %v472 = vadd.s32 %v469, %v467
        %v473 = vadd.s32 %v469, %v468
        %vm474 = vcmp.lt.s32.totalorder %v470, 32
        %vm475 = vcmp.lt.s32.totalorder %v471, 32
        %vm476 = vcmp.lt.s32.totalorder %v472, 32
        %vm477 = vcmp.lt.s32.totalorder %v473, 32
        %v478 = vsel %vm474, %v456, 0.0
        %v479 = vsel %vm474, %v457, 0.0
        %v480 = vsel %vm475, %v458, 0.0
        %v481 = vsel %vm475, %v459, 0.0
        %v482 = vsel %vm476, %v460, 0.0
        %v483 = vsel %vm476, %v461, 0.0
        %v484 = vsel %vm477, %v462, 0.0
        %v485 = vsel %vm477, %v463, 0.0
        %v486 = vld [vmem:[#allocation2] sm:$0xff]
        %v487 = vld [vmem:[#allocation2 + $0x8] sm:$0xff]
        %v488 = vld [vmem:[#allocation2 + $0x10] sm:$0xff]
        %v489 = vld [vmem:[#allocation2 + $0x18] sm:$0xff]
        %v490 = vld [vmem:[#allocation2 + $0x20] sm:$0xff]
        %v491 = vld [vmem:[#allocation2 + $0x28] sm:$0xff]
        %v492 = vld [vmem:[#allocation2 + $0x30] sm:$0xff]
        %v493 = vld [vmem:[#allocation2 + $0x38] sm:$0xff]
        %v494 = vadd.f32 %v486, %v478
        %v495 = vadd.f32 %v487, %v479
        %v496 = vadd.f32 %v488, %v480
        %v497 = vadd.f32 %v489, %v481
        %v498 = vadd.f32 %v490, %v482
        %v499 = vadd.f32 %v491, %v483
        %v500 = vadd.f32 %v492, %v484
        %v501 = vadd.f32 %v493, %v485
        %502 = vst [vmem:[#allocation2] sm:$0xff] %v494
        %503 = vst [vmem:[#allocation2 + $0x8] sm:$0xff] %v495
        %504 = vst [vmem:[#allocation2 + $0x10] sm:$0xff] %v496
        %505 = vst [vmem:[#allocation2 + $0x18] sm:$0xff] %v497
        %506 = vst [vmem:[#allocation2 + $0x20] sm:$0xff] %v498
        %507 = vst [vmem:[#allocation2 + $0x28] sm:$0xff] %v499
        %508 = vst [vmem:[#allocation2 + $0x30] sm:$0xff] %v500
        %509 = vst [vmem:[#allocation2 + $0x38] sm:$0xff] %v501
        // Predicated region
        $region41: #{tpu_custom_call.1} parent=27 // pred_check
          %p510 = pneg %p246
        $region42: #{tpu_custom_call.1} parent=27 // pred_check_branch
          %512 = sbr.rel (%p510) target = $region44
        $region43: #{tpu_custom_call.1} parent=27 // pred_region
          %v513 = vld [vmem:[#allocation2] sm:$0xff]
          %v514 = vld [vmem:[#allocation2 + $0x8] sm:$0xff]
          %v515 = vld [vmem:[#allocation2 + $0x10] sm:$0xff]
          %v516 = vld [vmem:[#allocation2 + $0x18] sm:$0xff]
          %v517 = vld [vmem:[#allocation2 + $0x20] sm:$0xff]
          %v518 = vld [vmem:[#allocation2 + $0x28] sm:$0xff]
          %v519 = vld [vmem:[#allocation2 + $0x30] sm:$0xff]
          %v520 = vld [vmem:[#allocation2 + $0x38] sm:$0xff]
          %v521 = vadd.f32 %v513, %v514
          %v522 = vadd.f32 %v521, %v515
          %v523 = vadd.f32 %v522, %v516
          %v524 = vadd.f32 %v523, %v517
          %v525 = vadd.f32 %v524, %v518
          %v526 = vadd.f32 %v525, %v519
          %v527 = vadd.f32 %v526, %v520
          %528 = vadd.xlane.f32.xlu0 %v527
          %v529 = vpop.xlane.xlu0 %528
          %v530 = vrot.slane %v529, 4
          %v531 = vadd.f32 %v529, %v530
          %v532 = vrot.slane %v531, 2
          %v533 = vadd.f32 %v531, %v532
          %v534 = vrot.slane %v533, 1
          %v535 = vadd.f32 %v533, %v534
          %s536 = vtos %v535
          %s537 = smul.f32 %s536, 0.00012207031
          %v538 = vstv %s537
          %539 = vst [vmem:[%s237] sm:$0xff] %v538
        $region44: #{tpu_custom_call.1} parent=27 // pred_fallthru
          _
        %s540 = sand.u32 %s106, 1
        %s541 = scalar_lea.sflag [#allocation5], %s540
        %s542 = sand.u32 %s106, 1
        %s543 = smul.addr %s542, 8
        %s544 = scalar_lea.vmem [#allocation8], %s543
        // Predicated region
        $region45: #{tpu_custom_call.1} parent=27 // pred_check
          %p545 = pneg %p116
        $region46: #{tpu_custom_call.1} parent=27 // pred_check_branch
          %547 = sbr.rel (%p545) target = $region48
        $region47: #{tpu_custom_call.1} parent=27 // pred_region
          %549 = vsyncadd %s541, 0
          %s550 = smul.addr %s26, 8
          %s551 = scalar_lea.hbm %s2, %s550
          %s553 = sshll.u32 %s544, 4
          %s554 = int_to_ptr.vmem [resolvable:$true] %s553
          %s555 = sshll.u32 %s551, 4
          %s556 = int_to_ptr.hbm [resolvable:$true] %s555
          %558 = dma.vmem_to_hbm [thread:$0]  %s554, 128, %s556, %s541
        $region48: #{tpu_custom_call.1} parent=27 // pred_fallthru
          _
      $region28: #{tpu_custom_call.1} parent=5 // pred_fallthru
        _
      %p559 = scmp.le.s32.totalorder 2, %s17
      // Predicated region
      $region49: #{tpu_custom_call.1} parent=5 // pred_check
        %p560 = pneg %p559
      $region50: #{tpu_custom_call.1} parent=5 // pred_check_branch
        %562 = sbr.rel (%p560) target = $region52
      $region51: #{tpu_custom_call.1} parent=5 // pred_region
        %s563 = ssub.s32 %s17, 2
        // Predicated region
        $region53: #{tpu_custom_call.1} parent=51 // pred_check
          %p564 = pneg %p122
        $region54: #{tpu_custom_call.1} parent=51 // pred_check_branch
          %566 = sbr.rel (%p564) target = $region56
        $region55: #{tpu_custom_call.1} parent=51 // pred_region
          %s567 = sand.u32 %s107, 1
          %s568 = scalar_lea.sflag [#allocation5], %s567
          %s569 = sand.u32 %s107, 1
          %s570 = smul.addr %s569, 8
          %s571 = scalar_lea.vmem [#allocation8], %s570
          %573 = dma.done %s568, 128
        $region56: #{tpu_custom_call.1} parent=51 // pred_fallthru
          _
      $region52: #{tpu_custom_call.1} parent=5 // pred_fallthru
        _
    $region6: #{tpu_custom_call.1} parent=1 // loop_footer
      %s21 = sadd.s32 1, %s17
    $region7: #{tpu_custom_call.1} parent=1 // loop_footer_branch
      %16 = sbr.rel target = $region3
    $region8: #{tpu_custom_call.1} parent=1 // loop_exit
      _
    %574 = vsyncpa [#allocation4], 1
    %s575 = scalar_lea.sflag [#allocation4], 1
    %576 = vsyncpa %s575, 1
    %577 = vsyncpa [#allocation7], 1
    %s578 = scalar_lea.sflag [#allocation7], 1
    %579 = vsyncpa %s578, 1
    %580 = vsyncpa [#allocation5], 1
    %s581 = scalar_lea.sflag [#allocation5], 1
    %582 = vsyncpa %s581, 1

</llo_original>
